<compile_context>
chip_gen: v7x
topology: tpu7x:2x2x1
jax: 0.10.0
libtpu: 0.0.40
codegen_flags: <defaults>
</compile_context>

<pallas_src>
import math
import functools

import jax
import jax.numpy as jnp
import numpy as np
from jax.experimental import pallas as pl
from jax.experimental.pallas import tpu as pltpu

_LOG_SCALES_MIN = -7.0
_INV_LN2 = 1.0 / math.log(2.0)


def _round_up(n, m):
    return ((n + m - 1) // m) * m


# ------------- shared elementwise math (used by kernel AND reference) --------
def _stable_sigmoid_and_softplus(z):
    """sigmoid(z) and softplus(z) sharing a single exp(-|z|)."""
    e = jnp.exp(-jnp.abs(z))
    sig = jnp.where(z >= 0, 1.0, e) / (1.0 + e)
    sp = jnp.maximum(z, 0.0) + jnp.log1p(e)
    return sig, sp


def _logistic_log_probs(x, miu, log_scale, bin_, x_min, x_max):
    """Per-mixture-component log prob.  `x` must already be broadcastable
    against miu/log_scale (mixture axis inserted)."""
    log_scale = jnp.maximum(log_scale, _LOG_SCALES_MIN)
    scale = jnp.exp(-log_scale)
    half = bin_ * 0.5
    plus_in = scale * (x + half - miu)
    min_in = scale * (x - half - miu)

    cdf_plus, sp_plus = _stable_sigmoid_and_softplus(plus_in)
    cdf_min, sp_min = _stable_sigmoid_and_softplus(min_in)

    cdf_delta = cdf_plus - cdf_min
    log_cdf_plus = plus_in - sp_plus            # log sigmoid(plus_in)
    log_one_minus_cdf_min = -sp_min             # log(1 - sigmoid(min_in))

    out_A = jnp.log(jnp.maximum(cdf_delta, 1e-12))
    is_max = x > (x_max - 0.0001)
    is_min = x < (x_min + 0.0001)
    return jnp.where(is_min, log_cdf_plus,
                     jnp.where(is_max, log_one_minus_cdf_min, out_A))


def _weighted_nll_bits(log_probs, weight, axis):
    """-LSE_axis(log_probs + log_softmax(weight)) / ln(2)."""
    m_w = jnp.max(weight, axis=axis, keepdims=True)
    log_norm = jnp.log(jnp.sum(jnp.exp(weight - m_w), axis=axis, keepdims=True))
    lpw = log_probs + (weight - m_w - log_norm)
    m = jnp.max(lpw, axis=axis)
    lse = jnp.log(jnp.sum(jnp.exp(lpw - jnp.expand_dims(m, axis)), axis=axis)) + m
    return -lse * _INV_LN2


# --------------------------- Pallas kernel ----------------------------------
def _lm_kernel(x_ref, p_ref, out_ref, *, bin_, x_min, x_max):
    x = x_ref[...]                                   # (bc, T)
    miu = p_ref[0]                                   # (K, bc, T)
    log_scale = p_ref[1]
    weight = p_ref[2]

    xb = x[None, :, :]                               # (1, bc, T) -> bcast over K
    log_probs = _logistic_log_probs(xb, miu, log_scale, bin_, x_min, x_max)
    out_ref[...] = _weighted_nll_bits(log_probs, weight, axis=0)


# --------------------------- JAX glue ----------------------------------------
def _prepare_packed(x, params, param_num, K):
    """Pack params into a single (3, K, B*C, H*W) array: [miu, log_scale, weight].
    For param_num == 3 this is a single reshape+transpose of `params` (no split
    copies).  The log_scale clamp is applied inside the kernel."""
    B, C, H, W = x.shape
    HW = H * W
    if param_num == 3:
        p = params.reshape(B, 3, C, K, HW)
    elif param_num == 4:
        assert C == 3
        miu, log_scale, weight, lamda = jnp.split(params, 4, axis=1)
        la, lb, lc = jnp.split(lamda, 3, axis=1)
        miu_r = miu[:, 0:K]
        miu_g = miu[:, K:2 * K] + jax.nn.sigmoid(la) * x[:, 0:1]
        miu_b = miu[:, 2 * K:] + jax.nn.sigmoid(lb) * x[:, 0:1] + jax.nn.sigmoid(lc) * x[:, 1:2]
        miu = jnp.concatenate([miu_r, miu_g, miu_b], axis=1)
        p = jnp.stack([miu, log_scale, weight], axis=1)      # (B, 3, C*K, H, W)
        p = p.reshape(B, 3, C, K, HW)
    else:
        raise RuntimeError("param_num must be 3 or 4")
    # (B, 3, C, K, HW) -> (3, K, B, C, HW) -> (3, K, B*C, HW)
    p = jnp.transpose(p, (1, 3, 0, 2, 4)).reshape(3, K, B * C, HW)
    return p.astype(jnp.float32)


def _choose_tiles(BC, HW, K, budget_bytes=20 * 1024 * 1024):
    """Pick (bc_tile, lane_tile) so the per-step working set (double-buffered
    I/O + live temporaries) stays under `budget_bytes` on all generations."""
    def step_bytes(bc_t, t):
        io = (3 * K + 2) * bc_t * t * 4          # packed params + x + out
        return 2 * io + 6 * K * bc_t * t * 4     # 2x double-buffer + temporaries

    bc_tile = 8 if BC % 8 == 0 else BC
    hw128 = _round_up(HW, 128)

    cands = [2048, 1024, 512, 256, 128]
    if hw128 <= 2048 and hw128 not in cands:
        cands.append(hw128)
    cands.sort(reverse=True)

    T = 128
    for cand in cands:
        if cand <= hw128 and step_bytes(bc_tile, cand) <= budget_bytes:
            T = cand
            break

    # grow the BC tile when spatial is small, to amortize per-step overhead
    while (BC % (bc_tile * 2) == 0 and bc_tile * 2 <= 256
           and step_bytes(bc_tile * 2, T) <= budget_bytes):
        bc_tile *= 2
    return bc_tile, T


def logistic_mixture_nll(quantized_x, params, param_num, bin_, x_min, x_max,
                         *, lane_tile=None, bc_tile=None,
                         vmem_limit_bytes=48 * 1024 * 1024):
    # TODO(synk): torch's `assert not torch.isnan(params).any()` host-side runtime
    # check is omitted (no clean in-kernel equivalent).
    B, C, H, W = quantized_x.shape
    K = params.shape[1] // C // param_num
    BC, HW = B * C, H * W

    p = _prepare_packed(quantized_x, params, param_num, K)       # (3, K, BC, HW)
    x2 = quantized_x.reshape(BC, HW).astype(jnp.float32)

    auto_bc, auto_T = _choose_tiles(BC, HW, K)
    bc_t = bc_tile if bc_tile is not None else auto_bc
    T = lane_tile if lane_tile is not None else auto_T
    assert BC % bc_t == 0, "bc_tile must divide B*C"

    HW_pad = _round_up(HW, T)
    if HW_pad != HW:
        pad = HW_pad - HW
        x2 = jnp.pad(x2, ((0, 0), (0, pad)))
        p = jnp.pad(p, ((0, 0), (0, 0), (0, 0), (0, pad)))

    grid = (BC // bc_t, HW_pad // T)
    kernel = functools.partial(_lm_kernel, bin_=float(bin_),
                               x_min=float(x_min), x_max=float(x_max))

    out = pl.pallas_call(
        kernel,
        out_shape=jax.ShapeDtypeStruct((BC, HW_pad), jnp.float32),
        grid_spec=pltpu.PrefetchScalarGridSpec(
            num_scalar_prefetch=0,
            grid=grid,
            in_specs=[
                pl.BlockSpec((bc_t, T), lambda i, j: (i, j)),
                pl.BlockSpec((3, K, bc_t, T), lambda i, j: (0, 0, i, j)),
            ],
            out_specs=pl.BlockSpec((bc_t, T), lambda i, j: (i, j)),
        ),
        compiler_params=pltpu.CompilerParams(
            dimension_semantics=("parallel", "parallel"),
            vmem_limit_bytes=vmem_limit_bytes),
    )(x2, p)

    return out[:, :HW].reshape(B, C, H, W)


# --------------------------- pure-JAX reference ------------------------------
def _param_prepare_ref(x, params, param_num, K):
    """Faithful mirror of LogisticMixture.param_prepare (for the reference)."""
    B, C, H, W = x.shape
    chunks = jnp.split(params, param_num, axis=1)
    if param_num == 3:
        miu, log_scale, weight = chunks
    elif param_num == 4:
        assert C == 3
        miu, log_scale, weight, lamda = chunks
        la, lb, lc = jnp.split(lamda, 3, axis=1)
        miu_r = miu[:, 0:K]
        miu_g = miu[:, K:2 * K] + jax.nn.sigmoid(la) * x[:, 0:1]
        miu_b = miu[:, 2 * K:] + jax.nn.sigmoid(lb) * x[:, 0:1] + jax.nn.sigmoid(lc) * x[:, 1:2]
        miu = jnp.concatenate([miu_r, miu_g, miu_b], axis=1)
    else:
        raise RuntimeError("param_num must be 3 or 4")
    miu = miu.reshape(B, C, K, H, W)
    log_scale = log_scale.reshape(B, C, K, H, W)
    weight = weight.reshape(B, C, K, H, W)
    return miu, log_scale, weight


def _reference_nll(quantized_x, params, param_num, bin_, x_min, x_max):
    B, C, H, W = quantized_x.shape
    K = params.shape[1] // C // param_num
    miu, log_scale, weight = _param_prepare_ref(quantized_x, params, param_num, K)
    x_out = quantized_x.reshape(B, C, 1, H, W)
    log_probs = _logistic_log_probs(x_out, miu, log_scale, bin_, x_min, x_max)
    return _weighted_nll_bits(log_probs, weight, axis=2)


# --------------------------- main --------------------------------------------
if __name__ == "__main__":
    key = jax.random.PRNGKey(0)

    # Tolerance note: log(clamp(cdf_delta, 1e-12)) is ill-conditioned when the
    # quantization interval falls deep in a component's tail (cdf_delta -> 0),
    # so last-ulp differences between Mosaic and XLA transcendentals on those
    # rare elements get amplified.  Kernel and reference now share identical
    # formulas, so 5e-3 leaves a wide margin.
    RTOL = ATOL = 5e-3

    # Case 1: param_num = 3
    B, C, H, W, K = 2, 4, 16, 16, 5
    param_num = 3
    bin_, x_min, x_max = 1.0, -8.0, 7.0
    k1, k2, k3, k4 = jax.random.split(key, 4)
    raw = jax.random.uniform(k1, (B, C, H, W), minval=x_min, maxval=x_max)
    qx = jnp.clip(jnp.round(raw / bin_) * bin_, x_min, x_max).astype(jnp.float32)
    params = jax.random.normal(k2, (B, C * K * param_num, H, W), dtype=jnp.float32)

    out = jax.block_until_ready(
        logistic_mixture_nll(qx, params, param_num, bin_, x_min, x_max))
    ref = _reference_nll(qx, params, param_num, bin_, x_min, x_max)
    np.testing.assert_allclose(np.asarray(out), np.asarray(ref), rtol=RTOL, atol=ATOL)

    # Case 2: param_num = 4 (requires C == 3)
    B2, C2, K2 = 2, 3, 5
    param_num4 = 4
    raw2 = jax.random.uniform(k3, (B2, C2, H, W), minval=x_min, maxval=x_max)
    qx2 = jnp.clip(jnp.round(raw2 / bin_) * bin_, x_min, x_max).astype(jnp.float32)
    params2 = jax.random.normal(k4, (B2, C2 * K2 * param_num4, H, W), dtype=jnp.float32)

    out2 = jax.block_until_ready(
        logistic_mixture_nll(qx2, params2, param_num4, bin_, x_min, x_max))
    ref2 = _reference_nll(qx2, params2, param_num4, bin_, x_min, x_max)
    np.testing.assert_allclose(np.asarray(out2), np.asarray(ref2), rtol=RTOL, atol=ATOL)

    print("KERNEL_OK")
</pallas_src>

<mosaic_0001>
module attributes {stable_mosaic.version = 11 : i64} {
  func.func @_lm_kernel(%arg0: i32, %arg1: i32, %arg2: memref<8x256xf32, #tpu.memory_space<vmem>>, %arg3: memref<3x5x8x256xf32, #tpu.memory_space<vmem>>, %arg4: memref<8x256xf32, #tpu.memory_space<vmem>>) attributes {dimension_semantics = [#tpu.dimension_semantics<parallel>, #tpu.dimension_semantics<parallel>], iteration_bounds = array<i64: 1, 1>, scalar_prefetch = 0 : i64, scratch_operands = 0 : i64, tpu.core_type = #tpu.core_type<tc>, window_params = [{transform_indices = @transform_0, window_bounds = array<i64: 8, 256>}, {transform_indices = @transform_1, window_bounds = array<i64: 3, 5, 8, 256>}, {transform_indices = @transform_2, window_bounds = array<i64: 8, 256>}]} {
    %c0 = arith.constant 0 : index
    %c0_0 = arith.constant 0 : index
    %0 = vector.load %arg2[%c0, %c0_0] : memref<8x256xf32, #tpu.memory_space<vmem>>, vector<8x256xf32>
    %c0_1 = arith.constant 0 : index
    %c0_2 = arith.constant 0 : index
    %c0_3 = arith.constant 0 : index
    %c0_4 = arith.constant 0 : index
    %1 = vector.load %arg3[%c0_1, %c0_2, %c0_3, %c0_4] : memref<3x5x8x256xf32, #tpu.memory_space<vmem>>, vector<1x5x8x256xf32>
    %2 = vector.shape_cast %1 : vector<1x5x8x256xf32> to vector<5x8x256xf32>
    %c1 = arith.constant 1 : index
    %c0_5 = arith.constant 0 : index
    %c0_6 = arith.constant 0 : index
    %c0_7 = arith.constant 0 : index
    %3 = vector.load %arg3[%c1, %c0_5, %c0_6, %c0_7] : memref<3x5x8x256xf32, #tpu.memory_space<vmem>>, vector<1x5x8x256xf32>
    %4 = vector.shape_cast %3 : vector<1x5x8x256xf32> to vector<5x8x256xf32>
    %c2 = arith.constant 2 : index
    %c0_8 = arith.constant 0 : index
    %c0_9 = arith.constant 0 : index
    %c0_10 = arith.constant 0 : index
    %5 = vector.load %arg3[%c2, %c0_8, %c0_9, %c0_10] : memref<3x5x8x256xf32, #tpu.memory_space<vmem>>, vector<1x5x8x256xf32>
    %6 = vector.shape_cast %5 : vector<1x5x8x256xf32> to vector<5x8x256xf32>
    %7 = vector.shape_cast %0 : vector<8x256xf32> to vector<1x8x256xf32>
    %cst = arith.constant -7.000000e+00 : f32
    %8 = vector.broadcast %cst : f32 to vector<5x8x256xf32>
    %9 = arith.maximumf %4, %8 : vector<5x8x256xf32>
    %cst_11 = arith.constant 0.000000e+00 : f32
    %10 = vector.broadcast %cst_11 : f32 to vector<5x8x256xf32>
    %11 = arith.subf %10, %9 : vector<5x8x256xf32>
    %12 = math.exp %11 : vector<5x8x256xf32>
    %cst_12 = arith.constant 5.000000e-01 : f32
    %13 = vector.broadcast %cst_12 : f32 to vector<1x8x256xf32>
    %14 = arith.addf %7, %13 : vector<1x8x256xf32>
    %15 = vector.broadcast %14 : vector<1x8x256xf32> to vector<5x8x256xf32>
    %16 = arith.subf %15, %2 : vector<5x8x256xf32>
    %17 = arith.mulf %12, %16 : vector<5x8x256xf32>
    %cst_13 = arith.constant 5.000000e-01 : f32
    %18 = vector.broadcast %cst_13 : f32 to vector<1x8x256xf32>
    %19 = arith.subf %7, %18 : vector<1x8x256xf32>
    %20 = vector.broadcast %19 : vector<1x8x256xf32> to vector<5x8x256xf32>
    %21 = arith.subf %20, %2 : vector<5x8x256xf32>
    %22 = arith.mulf %12, %21 : vector<5x8x256xf32>
    %23 = math.absf %17 : vector<5x8x256xf32>
    %cst_14 = arith.constant 0.000000e+00 : f32
    %24 = vector.broadcast %cst_14 : f32 to vector<5x8x256xf32>
    %25 = arith.subf %24, %23 : vector<5x8x256xf32>
    %26 = math.exp %25 : vector<5x8x256xf32>
    %cst_15 = arith.constant 0.000000e+00 : f32
    %27 = vector.broadcast %cst_15 : f32 to vector<5x8x256xf32>
    %28 = arith.cmpf oge, %17, %27 : vector<5x8x256xf32>
    %cst_16 = arith.constant 1.000000e+00 : f32
    %29 = vector.broadcast %cst_16 : f32 to vector<5x8x256xf32>
    %30 = arith.select %28, %29, %26 : vector<5x8x256xi1>, vector<5x8x256xf32>
    %cst_17 = arith.constant 1.000000e+00 : f32
    %31 = vector.broadcast %cst_17 : f32 to vector<5x8x256xf32>
    %32 = arith.addf %31, %26 : vector<5x8x256xf32>
    %33 = arith.divf %30, %32 : vector<5x8x256xf32>
    %cst_18 = arith.constant 0.000000e+00 : f32
    %34 = vector.broadcast %cst_18 : f32 to vector<5x8x256xf32>
    %35 = arith.maximumf %17, %34 : vector<5x8x256xf32>
    %36 = math.log1p %26 : vector<5x8x256xf32>
    %37 = arith.addf %35, %36 : vector<5x8x256xf32>
    %38 = math.absf %22 : vector<5x8x256xf32>
    %cst_19 = arith.constant 0.000000e+00 : f32
    %39 = vector.broadcast %cst_19 : f32 to vector<5x8x256xf32>
    %40 = arith.subf %39, %38 : vector<5x8x256xf32>
    %41 = math.exp %40 : vector<5x8x256xf32>
    %cst_20 = arith.constant 0.000000e+00 : f32
    %42 = vector.broadcast %cst_20 : f32 to vector<5x8x256xf32>
    %43 = arith.cmpf oge, %22, %42 : vector<5x8x256xf32>
    %cst_21 = arith.constant 1.000000e+00 : f32
    %44 = vector.broadcast %cst_21 : f32 to vector<5x8x256xf32>
    %45 = arith.select %43, %44, %41 : vector<5x8x256xi1>, vector<5x8x256xf32>
    %cst_22 = arith.constant 1.000000e+00 : f32
    %46 = vector.broadcast %cst_22 : f32 to vector<5x8x256xf32>
    %47 = arith.addf %46, %41 : vector<5x8x256xf32>
    %48 = arith.divf %45, %47 : vector<5x8x256xf32>
    %cst_23 = arith.constant 0.000000e+00 : f32
    %49 = vector.broadcast %cst_23 : f32 to vector<5x8x256xf32>
    %50 = arith.maximumf %22, %49 : vector<5x8x256xf32>
    %51 = math.log1p %41 : vector<5x8x256xf32>
    %52 = arith.addf %50, %51 : vector<5x8x256xf32>
    %53 = arith.subf %33, %48 : vector<5x8x256xf32>
    %54 = arith.subf %17, %37 : vector<5x8x256xf32>
    %cst_24 = arith.constant 0.000000e+00 : f32
    %55 = vector.broadcast %cst_24 : f32 to vector<5x8x256xf32>
    %56 = arith.subf %55, %52 : vector<5x8x256xf32>
    %cst_25 = arith.constant 9.99999996E-13 : f32
    %57 = vector.broadcast %cst_25 : f32 to vector<5x8x256xf32>
    %58 = arith.maximumf %53, %57 : vector<5x8x256xf32>
    %59 = math.log %58 : vector<5x8x256xf32>
    %cst_26 = arith.constant 6.99989986 : f32
    %60 = vector.broadcast %cst_26 : f32 to vector<1x8x256xf32>
    %61 = arith.cmpf ogt, %7, %60 : vector<1x8x256xf32>
    %cst_27 = arith.constant -7.99989986 : f32
    %62 = vector.broadcast %cst_27 : f32 to vector<1x8x256xf32>
    %63 = arith.cmpf olt, %7, %62 : vector<1x8x256xf32>
    %64 = vector.shape_cast %61 : vector<1x8x256xi1> to vector<1x8x256xi1>
    %65 = vector.broadcast %64 : vector<1x8x256xi1> to vector<5x8x256xi1>
    %66 = arith.select %65, %56, %59 : vector<5x8x256xi1>, vector<5x8x256xf32>
    %67 = vector.shape_cast %63 : vector<1x8x256xi1> to vector<1x8x256xi1>
    %68 = vector.broadcast %67 : vector<1x8x256xi1> to vector<5x8x256xi1>
    %69 = arith.select %68, %54, %66 : vector<5x8x256xi1>, vector<5x8x256xf32>
    %cst_28 = arith.constant dense<0xFF800000> : vector<8x256xf32>
    %70 = vector.multi_reduction <maximumf>, %6, %cst_28 [0] : vector<5x8x256xf32> to vector<8x256xf32>
    %71 = vector.shape_cast %70 : vector<8x256xf32> to vector<1x8x256xf32>
    %72 = vector.broadcast %71 : vector<1x8x256xf32> to vector<5x8x256xf32>
    %73 = arith.subf %6, %72 : vector<5x8x256xf32>
    %74 = math.exp %73 : vector<5x8x256xf32>
    %cst_29 = arith.constant dense<0.000000e+00> : vector<8x256xf32>
    %75 = vector.multi_reduction <add>, %74, %cst_29 [0] : vector<5x8x256xf32> to vector<8x256xf32>
    %76 = vector.shape_cast %75 : vector<8x256xf32> to vector<1x8x256xf32>
    %77 = math.log %76 : vector<1x8x256xf32>
    %78 = vector.broadcast %71 : vector<1x8x256xf32> to vector<5x8x256xf32>
    %79 = arith.subf %6, %78 : vector<5x8x256xf32>
    %80 = vector.broadcast %77 : vector<1x8x256xf32> to vector<5x8x256xf32>
    %81 = arith.subf %79, %80 : vector<5x8x256xf32>
    %82 = arith.addf %69, %81 : vector<5x8x256xf32>
    %cst_30 = arith.constant dense<0xFF800000> : vector<8x256xf32>
    %83 = vector.multi_reduction <maximumf>, %82, %cst_30 [0] : vector<5x8x256xf32> to vector<8x256xf32>
    %84 = vector.shape_cast %83 : vector<8x256xf32> to vector<1x8x256xf32>
    %85 = vector.broadcast %84 : vector<1x8x256xf32> to vector<5x8x256xf32>
    %86 = arith.subf %82, %85 : vector<5x8x256xf32>
    %87 = math.exp %86 : vector<5x8x256xf32>
    %cst_31 = arith.constant dense<0.000000e+00> : vector<8x256xf32>
    %88 = vector.multi_reduction <add>, %87, %cst_31 [0] : vector<5x8x256xf32> to vector<8x256xf32>
    %89 = math.log %88 : vector<8x256xf32>
    %90 = arith.addf %89, %83 : vector<8x256xf32>
    %cst_32 = arith.constant 0.000000e+00 : f32
    %91 = vector.broadcast %cst_32 : f32 to vector<8x256xf32>
    %92 = arith.subf %91, %90 : vector<8x256xf32>
    %cst_33 = arith.constant 1.44269502 : f32
    %93 = vector.broadcast %cst_33 : f32 to vector<8x256xf32>
    %94 = arith.mulf %92, %93 : vector<8x256xf32>
    %c0_34 = arith.constant 0 : index
    %c0_35 = arith.constant 0 : index
    %95 = vector.load %arg4[%c0_34, %c0_35] : memref<8x256xf32, #tpu.memory_space<vmem>>, vector<8x256xf32>
    tpu.vector_store %arg4[%c0_34, %c0_35], %94 {strides = array<i32>} : memref<8x256xf32, #tpu.memory_space<vmem>>, vector<8x256xf32>,
    return
  }
  func.func @transform_0(%arg0: i32, %arg1: i32) -> (i32, i32) {
    %c0_i32 = arith.constant 0 : i32
    return %arg0, %arg1 : i32, i32
  }
  func.func @transform_1(%arg0: i32, %arg1: i32) -> (i32, i32, i32, i32) {
    %c0_i32 = arith.constant 0 : i32
    %c0_i32_0 = arith.constant 0 : i32
    %c0_i32_1 = arith.constant 0 : i32
    return %c0_i32, %c0_i32_0, %arg0, %arg1 : i32, i32, i32, i32
  }
  func.func @transform_2(%arg0: i32, %arg1: i32) -> (i32, i32) {
    %c0_i32 = arith.constant 0 : i32
    return %arg0, %arg1 : i32, i32
  }
}

</mosaic_0001>

<llo_original>
// kernel: tpu_custom_call.1
$region0: #{tpu_custom_call.1}
  #allocation0 [shape = 'u32[]', space=smem, size = 0x4, offset = 0x4, fixed_abs, tag = 'smem constant byte address 0x4 - core index']
  #allocation1 [shape = 'u32[144,128]{1,0:T(1,128)}', space=vmem, size = 0x12000, scoped, tag = 'internal scratch']
  %s0 = inlined_call_operand.hbm [shape: f32[8,256], index: 0, kind: input, shape index: {}]
  %s1 = inlined_call_operand.hbm [shape: f32[3,5,8,256], index: 1, kind: input, shape index: {}]
  %s2 = inlined_call_operand.hbm [shape: f32[8,256], index: 2, kind: output, shape index: {}]
  %s3 = sld [smem:[#allocation0]]
  $region26: #{tpu_custom_call.1} parent=0
    _
  %s5 = ssub.s32 1, %s3
  %s6 = scalar_select 0, %s5, %s3
  $region1: #{tpu_custom_call.1} parent=0
    #allocation2 [shape = 'u8[8192]{0}', space=vmem, size = 0x2000, scoped, tag = 'input window, operand 0, single buffered']
    #allocation3 [shape = 's32[1]{0}', space=sflag, size = 0x4, scoped, tag = 'scoped memory for tpu_custom_call.1']
    #allocation4 [shape = 's32[1]{0}', space=sflag, size = 0x4, scoped, tag = 'scoped memory for tpu_custom_call.1']
    #allocation5 [shape = 'u8[122880]{0}', space=vmem, size = 0x1e000, scoped, tag = 'input window, operand 1, single buffered']
    #allocation6 [shape = 's32[1]{0}', space=sflag, size = 0x4, scoped, tag = 'scoped memory for tpu_custom_call.1']
    #allocation7 [shape = 'u8[8192]{0}', space=vmem, size = 0x2000, scoped, tag = 'output window, operand 0, single buffered']
    %7 = vsyncpa [#allocation3], 0
    %8 = vsyncpa [#allocation6], 0
    %9 = vsyncpa [#allocation4], 0
    // Predicated region
    $region2: #{tpu_custom_call.1} parent=1 // pred_check
      _
    $region3: #{tpu_custom_call.1} parent=1 // pred_check_branch
      %11 = sbr.rel (0) target = $region5
    $region4: #{tpu_custom_call.1} parent=1 // pred_region
      %s13 = ssub.s32 256, 256
      %14 = vsyncadd [#allocation3], %s13
      %s16 = sshll.u32 [#allocation2], 4
      %s17 = int_to_ptr.vmem [resolvable:$true] %s16
      %19 = dma.hbm_to_vmem [thread:$0]  %s0, 256, %s17, [#allocation3]
    $region5: #{tpu_custom_call.1} parent=1 // pred_fallthru
      _
    // Predicated region
    $region6: #{tpu_custom_call.1} parent=1 // pred_check
      _
    $region7: #{tpu_custom_call.1} parent=1 // pred_check_branch
      %21 = sbr.rel (0) target = $region9
    $region8: #{tpu_custom_call.1} parent=1 // pred_region
      %s23 = ssub.s32 3840, 3840
      %24 = vsyncadd [#allocation6], %s23
      %s25 = sshll.u32 [#allocation5], 4
      %s26 = int_to_ptr.vmem [resolvable:$true] %s25
      %31 = dma.hbm_to_vmem [thread:$0]  %s1, 3840, %s26, [#allocation6], 256, 256, 16
    $region9: #{tpu_custom_call.1} parent=1 // pred_fallthru
      _
    // Predicated region
    $region10: #{tpu_custom_call.1} parent=1 // pred_check
      _
    $region11: #{tpu_custom_call.1} parent=1 // pred_check_branch
      %33 = sbr.rel (0) target = $region13
    $region12: #{tpu_custom_call.1} parent=1 // pred_region
      %34 = dma.done [#allocation3], 256
    $region13: #{tpu_custom_call.1} parent=1 // pred_fallthru
      _
    // Predicated region
    $region14: #{tpu_custom_call.1} parent=1 // pred_check
      _
    $region15: #{tpu_custom_call.1} parent=1 // pred_check_branch
      %36 = sbr.rel (0) target = $region17
    $region16: #{tpu_custom_call.1} parent=1 // pred_region
      %37 = dma.done [#allocation6], 3840
    $region17: #{tpu_custom_call.1} parent=1 // pred_fallthru
      _
    %v38 = vld [vmem:[#allocation2] sm:$0xff]
    %v39 = vld [vmem:[#allocation2 + $0x8] sm:$0xff]
    %v40 = vld [vmem:[#allocation5] sm:$0xff]
    %v41 = vld [vmem:[#allocation5 + $0x8] sm:$0xff]
    %v42 = vld [vmem:[#allocation5 + $0x10] sm:$0xff]
    %v43 = vld [vmem:[#allocation5 + $0x18] sm:$0xff]
    %v44 = vld [vmem:[#allocation5 + $0x20] sm:$0xff]
    %v45 = vld [vmem:[#allocation5 + $0x28] sm:$0xff]
    %v46 = vld [vmem:[#allocation5 + $0x30] sm:$0xff]
    %v47 = vld [vmem:[#allocation5 + $0x38] sm:$0xff]
    %v48 = vld [vmem:[#allocation5 + $0x40] sm:$0xff]
    %v49 = vld [vmem:[#allocation5 + $0x48] sm:$0xff]
    %s50 = scalar_lea.vmem [#allocation5], 80
    %v51 = vld [vmem:[%s50] sm:$0xff]
    %v52 = vld [vmem:[%s50 + $0x8] sm:$0xff]
    %v53 = vld [vmem:[%s50 + $0x10] sm:$0xff]
    %v54 = vld [vmem:[%s50 + $0x18] sm:$0xff]
    %v55 = vld [vmem:[%s50 + $0x20] sm:$0xff]
    %v56 = vld [vmem:[%s50 + $0x28] sm:$0xff]
    %v57 = vld [vmem:[%s50 + $0x30] sm:$0xff]
    %v58 = vld [vmem:[%s50 + $0x38] sm:$0xff]
    %v59 = vld [vmem:[%s50 + $0x40] sm:$0xff]
    %v60 = vld [vmem:[%s50 + $0x48] sm:$0xff]
    %s61 = scalar_lea.vmem [#allocation5], 160
    %v62 = vld [vmem:[%s61] sm:$0xff]
    %v63 = vld [vmem:[%s61 + $0x8] sm:$0xff]
    %v64 = vld [vmem:[%s61 + $0x10] sm:$0xff]
    %v65 = vld [vmem:[%s61 + $0x18] sm:$0xff]
    %v66 = vld [vmem:[%s61 + $0x20] sm:$0xff]
    %v67 = vld [vmem:[%s61 + $0x28] sm:$0xff]
    %v68 = vld [vmem:[%s61 + $0x30] sm:$0xff]
    %v69 = vld [vmem:[%s61 + $0x38] sm:$0xff]
    %v70 = vld [vmem:[%s61 + $0x40] sm:$0xff]
    %v71 = vld [vmem:[%s61 + $0x48] sm:$0xff]
    %v72 = vmax.f32 %v51, -7.0
    %v73 = vmax.f32 %v52, -7.0
    %v74 = vmax.f32 %v53, -7.0
    %v75 = vmax.f32 %v54, -7.0
    %v76 = vmax.f32 %v55, -7.0
    %v77 = vmax.f32 %v56, -7.0
    %v78 = vmax.f32 %v57, -7.0
    %v79 = vmax.f32 %v58, -7.0
    %v80 = vmax.f32 %v59, -7.0
    %v81 = vmax.f32 %v60, -7.0
    %v82 = vsub.f32 0.0, %v72
    %v83 = vsub.f32 0.0, %v73
    %v84 = vsub.f32 0.0, %v74
    %v85 = vsub.f32 0.0, %v75
    %v86 = vsub.f32 0.0, %v76
    %v87 = vsub.f32 0.0, %v77
    %v88 = vsub.f32 0.0, %v78
    %v89 = vsub.f32 0.0, %v79
    %v90 = vsub.f32 0.0, %v80
    %v91 = vsub.f32 0.0, %v81
    %v92 = vmul.f32 %v82, 1.442695
    %v93 = vpow.pop %v92
    %v94 = vmul.f32 %v83, 1.442695
    %v95 = vpow.pop %v94
    %v96 = vmul.f32 %v84, 1.442695
    %v97 = vpow.pop %v96
    %v98 = vmul.f32 %v85, 1.442695
    %v99 = vpow.pop %v98
    %v100 = vmul.f32 %v86, 1.442695
    %v101 = vpow.pop %v100
    %v102 = vmul.f32 %v87, 1.442695
    %v103 = vpow.pop %v102
    %v104 = vmul.f32 %v88, 1.442695
    %v105 = vpow.pop %v104
    %v106 = vmul.f32 %v89, 1.442695
    %v107 = vpow.pop %v106
    %v108 = vmul.f32 %v90, 1.442695
    %v109 = vpow.pop %v108
    %v110 = vmul.f32 %v91, 1.442695
    %v111 = vpow.pop %v110
    %v112 = vadd.f32 %v38, 0.5
    %v113 = vadd.f32 %v39, 0.5
    %v114 = vsub.f32 %v112, %v40
    %v115 = vsub.f32 %v113, %v41
    %v116 = vsub.f32 %v112, %v42
    %v117 = vsub.f32 %v113, %v43
    %v118 = vsub.f32 %v112, %v44
    %v119 = vsub.f32 %v113, %v45
    %v120 = vsub.f32 %v112, %v46
    %v121 = vsub.f32 %v113, %v47
    %v122 = vsub.f32 %v112, %v48
    %v123 = vsub.f32 %v113, %v49
    %v124 = vmul.f32 %v93, %v114
    %v125 = vmul.f32 %v95, %v115
    %v126 = vmul.f32 %v97, %v116
    %v127 = vmul.f32 %v99, %v117
    %v128 = vmul.f32 %v101, %v118
    %v129 = vmul.f32 %v103, %v119
    %v130 = vmul.f32 %v105, %v120
    %v131 = vmul.f32 %v107, %v121
    %v132 = vmul.f32 %v109, %v122
    %v133 = vmul.f32 %v111, %v123
    %v134 = vsub.f32 %v38, 0.5
    %v135 = vsub.f32 %v39, 0.5
    %v136 = vsub.f32 %v134, %v40
    %v137 = vsub.f32 %v135, %v41
    %v138 = vsub.f32 %v134, %v42
    %v139 = vsub.f32 %v135, %v43
    %v140 = vsub.f32 %v134, %v44
    %v141 = vsub.f32 %v135, %v45
    %v142 = vsub.f32 %v134, %v46
    %v143 = vsub.f32 %v135, %v47
    %v144 = vsub.f32 %v134, %v48
    %v145 = vsub.f32 %v135, %v49
    %v146 = vmul.f32 %v93, %v136
    %v147 = vmul.f32 %v95, %v137
    %v148 = vmul.f32 %v97, %v138
    %v149 = vmul.f32 %v99, %v139
    %v150 = vmul.f32 %v101, %v140
    %v151 = vmul.f32 %v103, %v141
    %v152 = vmul.f32 %v105, %v142
    %v153 = vmul.f32 %v107, %v143
    %v154 = vmul.f32 %v109, %v144
    %v155 = vmul.f32 %v111, %v145
    %v156 = vand.u32 2147483647, %v124
    %v157 = vand.u32 2147483647, %v125
    %v158 = vand.u32 2147483647, %v126
    %v159 = vand.u32 2147483647, %v127
    %v160 = vand.u32 2147483647, %v128
    %v161 = vand.u32 2147483647, %v129
    %v162 = vand.u32 2147483647, %v130
    %v163 = vand.u32 2147483647, %v131
    %v164 = vand.u32 2147483647, %v132
    %v165 = vand.u32 2147483647, %v133
    %v166 = vsub.f32 0.0, %v156
    %v167 = vsub.f32 0.0, %v157
    %v168 = vsub.f32 0.0, %v158
    %v169 = vsub.f32 0.0, %v159
    %v170 = vsub.f32 0.0, %v160
    %v171 = vsub.f32 0.0, %v161
    %v172 = vsub.f32 0.0, %v162
    %v173 = vsub.f32 0.0, %v163
    %v174 = vsub.f32 0.0, %v164
    %v175 = vsub.f32 0.0, %v165
    %v176 = vmul.f32 %v166, 1.442695
    %v177 = vpow.pop %v176
    %v178 = vmul.f32 %v167, 1.442695
    %v179 = vpow.pop %v178
    %v180 = vmul.f32 %v168, 1.442695
    %v181 = vpow.pop %v180
    %v182 = vmul.f32 %v169, 1.442695
    %v183 = vpow.pop %v182
    %v184 = vmul.f32 %v170, 1.442695
    %v185 = vpow.pop %v184
    %v186 = vmul.f32 %v171, 1.442695
    %v187 = vpow.pop %v186
    %v188 = vmul.f32 %v172, 1.442695
    %v189 = vpow.pop %v188
    %v190 = vmul.f32 %v173, 1.442695
    %v191 = vpow.pop %v190
    %v192 = vmul.f32 %v174, 1.442695
    %v193 = vpow.pop %v192
    %v194 = vmul.f32 %v175, 1.442695
    %v195 = vpow.pop %v194
    %vm196 = vcmp.ge.f32.partialorder %v124, 0.0
    %vm197 = vcmp.ge.f32.partialorder %v125, 0.0
    %vm198 = vcmp.ge.f32.partialorder %v126, 0.0
    %vm199 = vcmp.ge.f32.partialorder %v127, 0.0
    %vm200 = vcmp.ge.f32.partialorder %v128, 0.0
    %vm201 = vcmp.ge.f32.partialorder %v129, 0.0
    %vm202 = vcmp.ge.f32.partialorder %v130, 0.0
    %vm203 = vcmp.ge.f32.partialorder %v131, 0.0
    %vm204 = vcmp.ge.f32.partialorder %v132, 0.0
    %vm205 = vcmp.ge.f32.partialorder %v133, 0.0
    %v206 = vsel %vm196, 1.0, %v177
    %v207 = vsel %vm197, 1.0, %v179
    %v208 = vsel %vm198, 1.0, %v181
    %v209 = vsel %vm199, 1.0, %v183
    %v210 = vsel %vm200, 1.0, %v185
    %v211 = vsel %vm201, 1.0, %v187
    %v212 = vsel %vm202, 1.0, %v189
    %v213 = vsel %vm203, 1.0, %v191
    %v214 = vsel %vm204, 1.0, %v193
    %v215 = vsel %vm205, 1.0, %v195
    %v216 = vadd.f32 %v177, 1.0
    %v217 = vadd.f32 %v179, 1.0
    %v218 = vadd.f32 %v181, 1.0
    %v219 = vadd.f32 %v183, 1.0
    %v220 = vadd.f32 %v185, 1.0
    %v221 = vadd.f32 %v187, 1.0
    %v222 = vadd.f32 %v189, 1.0
    %v223 = vadd.f32 %v191, 1.0
    %v224 = vadd.f32 %v193, 1.0
    %v225 = vadd.f32 %v195, 1.0
    %v226 = vrcp.pop %v216
    %v227 = vmul.f32 %v206, %v226
    %v228 = vrcp.pop %v217
    %v229 = vmul.f32 %v207, %v228
    %v230 = vrcp.pop %v218
    %v231 = vmul.f32 %v208, %v230
    %v232 = vrcp.pop %v219
    %v233 = vmul.f32 %v209, %v232
    %v234 = vrcp.pop %v220
    %v235 = vmul.f32 %v210, %v234
    %v236 = vrcp.pop %v221
    %v237 = vmul.f32 %v211, %v236
    %v238 = vrcp.pop %v222
    %v239 = vmul.f32 %v212, %v238
    %v240 = vrcp.pop %v223
    %v241 = vmul.f32 %v213, %v240
    %v242 = vrcp.pop %v224
    %v243 = vmul.f32 %v214, %v242
    %v244 = vrcp.pop %v225
    %v245 = vmul.f32 %v215, %v244
    %v246 = vmax.f32 %v124, 0.0
    %v247 = vmax.f32 %v125, 0.0
    %v248 = vmax.f32 %v126, 0.0
    %v249 = vmax.f32 %v127, 0.0
    %v250 = vmax.f32 %v128, 0.0
    %v251 = vmax.f32 %v129, 0.0
    %v252 = vmax.f32 %v130, 0.0
    %v253 = vmax.f32 %v131, 0.0
    %v254 = vmax.f32 %v132, 0.0
    %v255 = vmax.f32 %v133, 0.0
    %v256 = vadd.f32 %v177, 1.0
    %v257 = vlog2.pop %v256
    %v258 = vmul.f32 %v257, 0.6931472
    %v259 = vmul.f32 -0.5, %v177
    %v260 = vadd.f32 %v259, 1.0
    %v261 = vmul.f32 %v260, %v177
    %v262 = vand.u32 2147483647, %v177
    %vm263 = vcmp.lt.f32.partialorder %v262, 0.0004427343
    %v264 = vsel %vm263, %v261, %v258
    %v265 = vadd.f32 %v179, 1.0
    %v266 = vlog2.pop %v265
    %v267 = vmul.f32 %v266, 0.6931472
    %v268 = vmul.f32 -0.5, %v179
    %v269 = vadd.f32 %v268, 1.0
    %v270 = vmul.f32 %v269, %v179
    %v271 = vand.u32 2147483647, %v179
    %vm272 = vcmp.lt.f32.partialorder %v271, 0.0004427343
    %v273 = vsel %vm272, %v270, %v267
    %v274 = vadd.f32 %v181, 1.0
    %v275 = vlog2.pop %v274
    %v276 = vmul.f32 %v275, 0.6931472
    %v277 = vmul.f32 -0.5, %v181
    %v278 = vadd.f32 %v277, 1.0
    %v279 = vmul.f32 %v278, %v181
    %v280 = vand.u32 2147483647, %v181
    %vm281 = vcmp.lt.f32.partialorder %v280, 0.0004427343
    %v282 = vsel %vm281, %v279, %v276
    %v283 = vadd.f32 %v183, 1.0
    %v284 = vlog2.pop %v283
    %v285 = vmul.f32 %v284, 0.6931472
    %v286 = vmul.f32 -0.5, %v183
    %v287 = vadd.f32 %v286, 1.0
    %v288 = vmul.f32 %v287, %v183
    %v289 = vand.u32 2147483647, %v183
    %vm290 = vcmp.lt.f32.partialorder %v289, 0.0004427343
    %v291 = vsel %vm290, %v288, %v285
    %v292 = vadd.f32 %v185, 1.0
    %v293 = vlog2.pop %v292
    %v294 = vmul.f32 %v293, 0.6931472
    %v295 = vmul.f32 -0.5, %v185
    %v296 = vadd.f32 %v295, 1.0
    %v297 = vmul.f32 %v296, %v185
    %v298 = vand.u32 2147483647, %v185
    %vm299 = vcmp.lt.f32.partialorder %v298, 0.0004427343
    %v300 = vsel %vm299, %v297, %v294
    %v301 = vadd.f32 %v187, 1.0
    %v302 = vlog2.pop %v301
    %v303 = vmul.f32 %v302, 0.6931472
    %v304 = vmul.f32 -0.5, %v187
    %v305 = vadd.f32 %v304, 1.0
    %v306 = vmul.f32 %v305, %v187
    %v307 = vand.u32 2147483647, %v187
    %vm308 = vcmp.lt.f32.partialorder %v307, 0.0004427343
    %v309 = vsel %vm308, %v306, %v303
    %v310 = vadd.f32 %v189, 1.0
    %v311 = vlog2.pop %v310
    %v312 = vmul.f32 %v311, 0.6931472
    %v313 = vmul.f32 -0.5, %v189
    %v314 = vadd.f32 %v313, 1.0
    %v315 = vmul.f32 %v314, %v189
    %v316 = vand.u32 2147483647, %v189
    %vm317 = vcmp.lt.f32.partialorder %v316, 0.0004427343
    %v318 = vsel %vm317, %v315, %v312
    %v319 = vadd.f32 %v191, 1.0
    %v320 = vlog2.pop %v319
    %v321 = vmul.f32 %v320, 0.6931472
    %v322 = vmul.f32 -0.5, %v191
    %v323 = vadd.f32 %v322, 1.0
    %v324 = vmul.f32 %v323, %v191
    %v325 = vand.u32 2147483647, %v191
    %vm326 = vcmp.lt.f32.partialorder %v325, 0.0004427343
    %v327 = vsel %vm326, %v324, %v321
    %v328 = vadd.f32 %v193, 1.0
    %v329 = vlog2.pop %v328
    %v330 = vmul.f32 %v329, 0.6931472
    %v331 = vmul.f32 -0.5, %v193
    %v332 = vadd.f32 %v331, 1.0
    %v333 = vmul.f32 %v332, %v193
    %v334 = vand.u32 2147483647, %v193
    %vm335 = vcmp.lt.f32.partialorder %v334, 0.0004427343
    %v336 = vsel %vm335, %v333, %v330
    %v337 = vadd.f32 %v195, 1.0
    %v338 = vlog2.pop %v337
    %v339 = vmul.f32 %v338, 0.6931472
    %v340 = vmul.f32 -0.5, %v195
    %v341 = vadd.f32 %v340, 1.0
    %v342 = vmul.f32 %v341, %v195
    %v343 = vand.u32 2147483647, %v195
    %vm344 = vcmp.lt.f32.partialorder %v343, 0.0004427343
    %v345 = vsel %vm344, %v342, %v339
    %v346 = vadd.f32 %v246, %v264
    %v347 = vadd.f32 %v247, %v273
    %v348 = vadd.f32 %v248, %v282
    %v349 = vadd.f32 %v249, %v291
    %v350 = vadd.f32 %v250, %v300
    %v351 = vadd.f32 %v251, %v309
    %v352 = vadd.f32 %v252, %v318
    %v353 = vadd.f32 %v253, %v327
    %v354 = vadd.f32 %v254, %v336
    %v355 = vadd.f32 %v255, %v345
    %v356 = vand.u32 2147483647, %v146
    %v357 = vand.u32 2147483647, %v147
    %v358 = vand.u32 2147483647, %v148
    %v359 = vand.u32 2147483647, %v149
    %v360 = vand.u32 2147483647, %v150
    %v361 = vand.u32 2147483647, %v151
    %v362 = vand.u32 2147483647, %v152
    %v363 = vand.u32 2147483647, %v153
    %v364 = vand.u32 2147483647, %v154
    %v365 = vand.u32 2147483647, %v155
    %v366 = vsub.f32 0.0, %v356
    %v367 = vsub.f32 0.0, %v357
    %v368 = vsub.f32 0.0, %v358
    %v369 = vsub.f32 0.0, %v359
    %v370 = vsub.f32 0.0, %v360
    %v371 = vsub.f32 0.0, %v361
    %v372 = vsub.f32 0.0, %v362
    %v373 = vsub.f32 0.0, %v363
    %v374 = vsub.f32 0.0, %v364
    %v375 = vsub.f32 0.0, %v365
    %v376 = vmul.f32 %v366, 1.442695
    %v377 = vpow.pop %v376
    %v378 = vmul.f32 %v367, 1.442695
    %v379 = vpow.pop %v378
    %v380 = vmul.f32 %v368, 1.442695
    %v381 = vpow.pop %v380
    %v382 = vmul.f32 %v369, 1.442695
    %v383 = vpow.pop %v382
    %v384 = vmul.f32 %v370, 1.442695
    %v385 = vpow.pop %v384
    %v386 = vmul.f32 %v371, 1.442695
    %v387 = vpow.pop %v386
    %v388 = vmul.f32 %v372, 1.442695
    %v389 = vpow.pop %v388
    %v390 = vmul.f32 %v373, 1.442695
    %v391 = vpow.pop %v390
    %v392 = vmul.f32 %v374, 1.442695
    %v393 = vpow.pop %v392
    %v394 = vmul.f32 %v375, 1.442695
    %v395 = vpow.pop %v394
    %vm396 = vcmp.ge.f32.partialorder %v146, 0.0
    %vm397 = vcmp.ge.f32.partialorder %v147, 0.0
    %vm398 = vcmp.ge.f32.partialorder %v148, 0.0
    %vm399 = vcmp.ge.f32.partialorder %v149, 0.0
    %vm400 = vcmp.ge.f32.partialorder %v150, 0.0
    %vm401 = vcmp.ge.f32.partialorder %v151, 0.0
    %vm402 = vcmp.ge.f32.partialorder %v152, 0.0
    %vm403 = vcmp.ge.f32.partialorder %v153, 0.0
    %vm404 = vcmp.ge.f32.partialorder %v154, 0.0
    %vm405 = vcmp.ge.f32.partialorder %v155, 0.0
    %v406 = vsel %vm396, 1.0, %v377
    %v407 = vsel %vm397, 1.0, %v379
    %v408 = vsel %vm398, 1.0, %v381
    %v409 = vsel %vm399, 1.0, %v383
    %v410 = vsel %vm400, 1.0, %v385
    %v411 = vsel %vm401, 1.0, %v387
    %v412 = vsel %vm402, 1.0, %v389
    %v413 = vsel %vm403, 1.0, %v391
    %v414 = vsel %vm404, 1.0, %v393
    %v415 = vsel %vm405, 1.0, %v395
    %v416 = vadd.f32 %v377, 1.0
    %v417 = vadd.f32 %v379, 1.0
    %v418 = vadd.f32 %v381, 1.0
    %v419 = vadd.f32 %v383, 1.0
    %v420 = vadd.f32 %v385, 1.0
    %v421 = vadd.f32 %v387, 1.0
    %v422 = vadd.f32 %v389, 1.0
    %v423 = vadd.f32 %v391, 1.0
    %v424 = vadd.f32 %v393, 1.0
    %v425 = vadd.f32 %v395, 1.0
    %v426 = vrcp.pop %v416
    %v427 = vmul.f32 %v406, %v426
    %v428 = vrcp.pop %v417
    %v429 = vmul.f32 %v407, %v428
    %v430 = vrcp.pop %v418
    %v431 = vmul.f32 %v408, %v430
    %v432 = vrcp.pop %v419
    %v433 = vmul.f32 %v409, %v432
    %v434 = vrcp.pop %v420
    %v435 = vmul.f32 %v410, %v434
    %v436 = vrcp.pop %v421
    %v437 = vmul.f32 %v411, %v436
    %v438 = vrcp.pop %v422
    %v439 = vmul.f32 %v412, %v438
    %v440 = vrcp.pop %v423
    %v441 = vmul.f32 %v413, %v440
    %v442 = vrcp.pop %v424
    %v443 = vmul.f32 %v414, %v442
    %v444 = vrcp.pop %v425
    %v445 = vmul.f32 %v415, %v444
    %v446 = vmax.f32 %v146, 0.0
    %v447 = vmax.f32 %v147, 0.0
    %v448 = vmax.f32 %v148, 0.0
    %v449 = vmax.f32 %v149, 0.0
    %v450 = vmax.f32 %v150, 0.0
    %v451 = vmax.f32 %v151, 0.0
    %v452 = vmax.f32 %v152, 0.0
    %v453 = vmax.f32 %v153, 0.0
    %v454 = vmax.f32 %v154, 0.0
    %v455 = vmax.f32 %v155, 0.0
    %v456 = vadd.f32 %v377, 1.0
    %v457 = vlog2.pop %v456
    %v458 = vmul.f32 %v457, 0.6931472
    %v459 = vmul.f32 -0.5, %v377
    %v460 = vadd.f32 %v459, 1.0
    %v461 = vmul.f32 %v460, %v377
    %v462 = vand.u32 2147483647, %v377
    %vm463 = vcmp.lt.f32.partialorder %v462, 0.0004427343
    %v464 = vsel %vm463, %v461, %v458
    %v465 = vadd.f32 %v379, 1.0
    %v466 = vlog2.pop %v465
    %v467 = vmul.f32 %v466, 0.6931472
    %v468 = vmul.f32 -0.5, %v379
    %v469 = vadd.f32 %v468, 1.0
    %v470 = vmul.f32 %v469, %v379
    %v471 = vand.u32 2147483647, %v379
    %vm472 = vcmp.lt.f32.partialorder %v471, 0.0004427343
    %v473 = vsel %vm472, %v470, %v467
    %v474 = vadd.f32 %v381, 1.0
    %v475 = vlog2.pop %v474
    %v476 = vmul.f32 %v475, 0.6931472
    %v477 = vmul.f32 -0.5, %v381
    %v478 = vadd.f32 %v477, 1.0
    %v479 = vmul.f32 %v478, %v381
    %v480 = vand.u32 2147483647, %v381
    %vm481 = vcmp.lt.f32.partialorder %v480, 0.0004427343
    %v482 = vsel %vm481, %v479, %v476
    %v483 = vadd.f32 %v383, 1.0
    %v484 = vlog2.pop %v483
    %v485 = vmul.f32 %v484, 0.6931472
    %v486 = vmul.f32 -0.5, %v383
    %v487 = vadd.f32 %v486, 1.0
    %v488 = vmul.f32 %v487, %v383
    %v489 = vand.u32 2147483647, %v383
    %vm490 = vcmp.lt.f32.partialorder %v489, 0.0004427343
    %v491 = vsel %vm490, %v488, %v485
    %v492 = vadd.f32 %v385, 1.0
    %v493 = vlog2.pop %v492
    %v494 = vmul.f32 %v493, 0.6931472
    %v495 = vmul.f32 -0.5, %v385
    %v496 = vadd.f32 %v495, 1.0
    %v497 = vmul.f32 %v496, %v385
    %v498 = vand.u32 2147483647, %v385
    %vm499 = vcmp.lt.f32.partialorder %v498, 0.0004427343
    %v500 = vsel %vm499, %v497, %v494
    %v501 = vadd.f32 %v387, 1.0
    %v502 = vlog2.pop %v501
    %v503 = vmul.f32 %v502, 0.6931472
    %v504 = vmul.f32 -0.5, %v387
    %v505 = vadd.f32 %v504, 1.0
    %v506 = vmul.f32 %v505, %v387
    %v507 = vand.u32 2147483647, %v387
    %vm508 = vcmp.lt.f32.partialorder %v507, 0.0004427343
    %v509 = vsel %vm508, %v506, %v503
    %v510 = vadd.f32 %v389, 1.0
    %v511 = vlog2.pop %v510
    %v512 = vmul.f32 %v511, 0.6931472
    %v513 = vmul.f32 -0.5, %v389
    %v514 = vadd.f32 %v513, 1.0
    %v515 = vmul.f32 %v514, %v389
    %v516 = vand.u32 2147483647, %v389
    %vm517 = vcmp.lt.f32.partialorder %v516, 0.0004427343
    %v518 = vsel %vm517, %v515, %v512
    %v519 = vadd.f32 %v391, 1.0
    %v520 = vlog2.pop %v519
    %v521 = vmul.f32 %v520, 0.6931472
    %v522 = vmul.f32 -0.5, %v391
    %v523 = vadd.f32 %v522, 1.0
    %v524 = vmul.f32 %v523, %v391
    %v525 = vand.u32 2147483647, %v391
    %vm526 = vcmp.lt.f32.partialorder %v525, 0.0004427343
    %v527 = vsel %vm526, %v524, %v521
    %v528 = vadd.f32 %v393, 1.0
    %v529 = vlog2.pop %v528
    %v530 = vmul.f32 %v529, 0.6931472
    %v531 = vmul.f32 -0.5, %v393
    %v532 = vadd.f32 %v531, 1.0
    %v533 = vmul.f32 %v532, %v393
    %v534 = vand.u32 2147483647, %v393
    %vm535 = vcmp.lt.f32.partialorder %v534, 0.0004427343
    %v536 = vsel %vm535, %v533, %v530
    %v537 = vadd.f32 %v395, 1.0
    %v538 = vlog2.pop %v537
    %v539 = vmul.f32 %v538, 0.6931472
    %v540 = vmul.f32 -0.5, %v395
    %v541 = vadd.f32 %v540, 1.0
    %v542 = vmul.f32 %v541, %v395
    %v543 = vand.u32 2147483647, %v395
    %vm544 = vcmp.lt.f32.partialorder %v543, 0.0004427343
    %v545 = vsel %vm544, %v542, %v539
    %v546 = vadd.f32 %v446, %v464
    %v547 = vadd.f32 %v447, %v473
    %v548 = vadd.f32 %v448, %v482
    %v549 = vadd.f32 %v449, %v491
    %v550 = vadd.f32 %v450, %v500
    %v551 = vadd.f32 %v451, %v509
    %v552 = vadd.f32 %v452, %v518
    %v553 = vadd.f32 %v453, %v527
    %v554 = vadd.f32 %v454, %v536
    %v555 = vadd.f32 %v455, %v545
    %v556 = vsub.f32 %v227, %v427
    %v557 = vsub.f32 %v229, %v429
    %v558 = vsub.f32 %v231, %v431
    %v559 = vsub.f32 %v233, %v433
    %v560 = vsub.f32 %v235, %v435
    %v561 = vsub.f32 %v237, %v437
    %v562 = vsub.f32 %v239, %v439
    %v563 = vsub.f32 %v241, %v441
    %v564 = vsub.f32 %v243, %v443
    %v565 = vsub.f32 %v245, %v445
    %v566 = vsub.f32 %v124, %v346
    %v567 = vsub.f32 %v125, %v347
    %v568 = vsub.f32 %v126, %v348
    %v569 = vsub.f32 %v127, %v349
    %v570 = vsub.f32 %v128, %v350
    %v571 = vsub.f32 %v129, %v351
    %v572 = vsub.f32 %v130, %v352
    %v573 = vsub.f32 %v131, %v353
    %v574 = vsub.f32 %v132, %v354
    %v575 = vsub.f32 %v133, %v355
    %v576 = vsub.f32 0.0, %v546
    %v577 = vsub.f32 0.0, %v547
    %v578 = vsub.f32 0.0, %v548
    %v579 = vsub.f32 0.0, %v549
    %v580 = vsub.f32 0.0, %v550
    %v581 = vsub.f32 0.0, %v551
    %v582 = vsub.f32 0.0, %v552
    %v583 = vsub.f32 0.0, %v553
    %v584 = vsub.f32 0.0, %v554
    %v585 = vsub.f32 0.0, %v555
    %v586 = vmax.f32 %v556, 1e-12
    %v587 = vmax.f32 %v557, 1e-12
    %v588 = vmax.f32 %v558, 1e-12
    %v589 = vmax.f32 %v559, 1e-12
    %v590 = vmax.f32 %v560, 1e-12
    %v591 = vmax.f32 %v561, 1e-12
    %v592 = vmax.f32 %v562, 1e-12
    %v593 = vmax.f32 %v563, 1e-12
    %v594 = vmax.f32 %v564, 1e-12
    %v595 = vmax.f32 %v565, 1e-12
    %v596 = vlog2.pop %v586
    %v597 = vmul.f32 %v596, 0.6931472
    %v598 = vlog2.pop %v587
    %v599 = vmul.f32 %v598, 0.6931472
    %v600 = vlog2.pop %v588
    %v601 = vmul.f32 %v600, 0.6931472
    %v602 = vlog2.pop %v589
    %v603 = vmul.f32 %v602, 0.6931472
    %v604 = vlog2.pop %v590
    %v605 = vmul.f32 %v604, 0.6931472
    %v606 = vlog2.pop %v591
    %v607 = vmul.f32 %v606, 0.6931472
    %v608 = vlog2.pop %v592
    %v609 = vmul.f32 %v608, 0.6931472
    %v610 = vlog2.pop %v593
    %v611 = vmul.f32 %v610, 0.6931472
    %v612 = vlog2.pop %v594
    %v613 = vmul.f32 %v612, 0.6931472
    %v614 = vlog2.pop %v595
    %v615 = vmul.f32 %v614, 0.6931472
    %vm616 = vcmp.gt.f32.partialorder %v38, 6.9999
    %vm617 = vcmp.gt.f32.partialorder %v39, 6.9999
    %vm618 = vcmp.lt.f32.partialorder %v38, -7.9999
    %vm619 = vcmp.lt.f32.partialorder %v39, -7.9999
    %v620 = vsel %vm616, 1, 0
    %v621 = vsel %vm617, 1, 0
    %vm622 = vcmp.eq.s32.totalorder %v620, 1
    %vm623 = vcmp.eq.s32.totalorder %v621, 1
    %v624 = vsel %vm622, %v576, %v597
    %v625 = vsel %vm623, %v577, %v599
    %v626 = vsel %vm622, %v578, %v601
    %v627 = vsel %vm623, %v579, %v603
    %v628 = vsel %vm622, %v580, %v605
    %v629 = vsel %vm623, %v581, %v607
    %v630 = vsel %vm622, %v582, %v609
    %v631 = vsel %vm623, %v583, %v611
    %v632 = vsel %vm622, %v584, %v613
    %v633 = vsel %vm623, %v585, %v615
    %v634 = vsel %vm618, 1, 0
    %v635 = vsel %vm619, 1, 0
    %vm636 = vcmp.eq.s32.totalorder %v634, 1
    %vm637 = vcmp.eq.s32.totalorder %v635, 1
    %v638 = vsel %vm636, %v566, %v624
    %v639 = vsel %vm637, %v567, %v625
    %v640 = vsel %vm636, %v568, %v626
    %v641 = vsel %vm637, %v569, %v627
    %v642 = vsel %vm636, %v570, %v628
    %v643 = vsel %vm637, %v571, %v629
    %v644 = vsel %vm636, %v572, %v630
    %v645 = vsel %vm637, %v573, %v631
    %v646 = vsel %vm636, %v574, %v632
    %v647 = vsel %vm637, %v575, %v633
    %v648 = vmax.f32 %v62, %v66
    %v649 = vmax.f32 %v64, %v68
    %v650 = vmax.f32 %v648, %v70
    %v651 = vmax.f32 %v650, %v649
    %v652 = vmax.f32 %v63, %v67
    %v653 = vmax.f32 %v65, %v69
    %v654 = vmax.f32 %v652, %v71
    %v655 = vmax.f32 %v654, %v653
    %v656 = vsub.f32 %v62, %v651
    %v657 = vsub.f32 %v63, %v655
    %v658 = vsub.f32 %v64, %v651
    %v659 = vsub.f32 %v65, %v655
    %v660 = vsub.f32 %v66, %v651
    %v661 = vsub.f32 %v67, %v655
    %v662 = vsub.f32 %v68, %v651
    %v663 = vsub.f32 %v69, %v655
    %v664 = vsub.f32 %v70, %v651
    %v665 = vsub.f32 %v71, %v655
    %v666 = vmul.f32 %v656, 1.442695
    %v667 = vpow.pop %v666
    %v668 = vmul.f32 %v657, 1.442695
    %v669 = vpow.pop %v668
    %v670 = vmul.f32 %v658, 1.442695
    %v671 = vpow.pop %v670
    %v672 = vmul.f32 %v659, 1.442695
    %v673 = vpow.pop %v672
    %v674 = vmul.f32 %v660, 1.442695
    %v675 = vpow.pop %v674
    %v676 = vmul.f32 %v661, 1.442695
    %v677 = vpow.pop %v676
    %v678 = vmul.f32 %v662, 1.442695
    %v679 = vpow.pop %v678
    %v680 = vmul.f32 %v663, 1.442695
    %v681 = vpow.pop %v680
    %v682 = vmul.f32 %v664, 1.442695
    %v683 = vpow.pop %v682
    %v684 = vmul.f32 %v665, 1.442695
    %v685 = vpow.pop %v684
    %v686 = vadd.f32 %v667, %v671
    %v687 = vadd.f32 %v686, %v675
    %v688 = vadd.f32 %v687, %v679
    %v689 = vadd.f32 %v688, %v683
    %v690 = vadd.f32 %v669, %v673
    %v691 = vadd.f32 %v690, %v677
    %v692 = vadd.f32 %v691, %v681
    %v693 = vadd.f32 %v692, %v685
    %v694 = vlog2.pop %v689
    %v695 = vmul.f32 %v694, 0.6931472
    %v696 = vlog2.pop %v693
    %v697 = vmul.f32 %v696, 0.6931472
    %v698 = vsub.f32 %v656, %v695
    %v699 = vsub.f32 %v657, %v697
    %v700 = vsub.f32 %v658, %v695
    %v701 = vsub.f32 %v659, %v697
    %v702 = vsub.f32 %v660, %v695
    %v703 = vsub.f32 %v661, %v697
    %v704 = vsub.f32 %v662, %v695
    %v705 = vsub.f32 %v663, %v697
    %v706 = vsub.f32 %v664, %v695
    %v707 = vsub.f32 %v665, %v697
    %v708 = vadd.f32 %v638, %v698
    %v709 = vadd.f32 %v639, %v699
    %v710 = vadd.f32 %v640, %v700
    %v711 = vadd.f32 %v641, %v701
    %v712 = vadd.f32 %v642, %v702
    %v713 = vadd.f32 %v643, %v703
    %v714 = vadd.f32 %v644, %v704
    %v715 = vadd.f32 %v645, %v705
    %v716 = vadd.f32 %v646, %v706
    %v717 = vadd.f32 %v647, %v707
    %v718 = vmax.f32 %v708, %v712
    %v719 = vmax.f32 %v710, %v714
    %v720 = vmax.f32 %v718, %v716
    %v721 = vmax.f32 %v720, %v719
    %v722 = vmax.f32 %v709, %v713
    %v723 = vmax.f32 %v711, %v715
    %v724 = vmax.f32 %v722, %v717
    %v725 = vmax.f32 %v724, %v723
    %v726 = vsub.f32 %v708, %v721
    %v727 = vsub.f32 %v709, %v725
    %v728 = vsub.f32 %v710, %v721
    %v729 = vsub.f32 %v711, %v725
    %v730 = vsub.f32 %v712, %v721
    %v731 = vsub.f32 %v713, %v725
    %v732 = vsub.f32 %v714, %v721
    %v733 = vsub.f32 %v715, %v725
    %v734 = vsub.f32 %v716, %v721
    %v735 = vsub.f32 %v717, %v725
    %v736 = vmul.f32 %v726, 1.442695
    %v737 = vpow.pop %v736
    %v738 = vmul.f32 %v727, 1.442695
    %v739 = vpow.pop %v738
    %v740 = vmul.f32 %v728, 1.442695
    %v741 = vpow.pop %v740
    %v742 = vmul.f32 %v729, 1.442695
    %v743 = vpow.pop %v742
    %v744 = vmul.f32 %v730, 1.442695
    %v745 = vpow.pop %v744
    %v746 = vmul.f32 %v731, 1.442695
    %v747 = vpow.pop %v746
    %v748 = vmul.f32 %v732, 1.442695
    %v749 = vpow.pop %v748
    %v750 = vmul.f32 %v733, 1.442695
    %v751 = vpow.pop %v750
    %v752 = vmul.f32 %v734, 1.442695
    %v753 = vpow.pop %v752
    %v754 = vmul.f32 %v735, 1.442695
    %v755 = vpow.pop %v754
    %v756 = vadd.f32 %v737, %v741
    %v757 = vadd.f32 %v756, %v745
    %v758 = vadd.f32 %v757, %v749
    %v759 = vadd.f32 %v758, %v753
    %v760 = vadd.f32 %v739, %v743
    %v761 = vadd.f32 %v760, %v747
    %v762 = vadd.f32 %v761, %v751
    %v763 = vadd.f32 %v762, %v755
    %v764 = vlog2.pop %v759
    %v765 = vmul.f32 %v764, 0.6931472
    %v766 = vlog2.pop %v763
    %v767 = vmul.f32 %v766, 0.6931472
    %v768 = vadd.f32 %v765, %v721
    %v769 = vadd.f32 %v767, %v725
    %v770 = vsub.f32 0.0, %v768
    %v771 = vsub.f32 0.0, %v769
    %v772 = vmul.f32 %v770, 1.442695
    %v773 = vmul.f32 %v771, 1.442695
    %774 = vst [vmem:[#allocation7] sm:$0xff] %v772
    %775 = vst [vmem:[#allocation7 + $0x8] sm:$0xff] %v773
    // Predicated region
    $region18: #{tpu_custom_call.1} parent=1 // pred_check
      _
    $region19: #{tpu_custom_call.1} parent=1 // pred_check_branch
      %777 = sbr.rel (0) target = $region21
    $region20: #{tpu_custom_call.1} parent=1 // pred_region
      %s779 = ssub.s32 256, 256
      %780 = vsyncadd [#allocation4], %s779
      %s782 = sshll.u32 [#allocation7], 4
      %s783 = int_to_ptr.vmem [resolvable:$true] %s782
      %785 = dma.vmem_to_hbm [thread:$0]  %s783, 256, %s2, [#allocation4]
    $region21: #{tpu_custom_call.1} parent=1 // pred_fallthru
      _
    // Predicated region
    $region22: #{tpu_custom_call.1} parent=1 // pred_check
      _
    $region23: #{tpu_custom_call.1} parent=1 // pred_check_branch
      %787 = sbr.rel (0) target = $region25
    $region24: #{tpu_custom_call.1} parent=1 // pred_region
      %788 = dma.done [#allocation4], 256
    $region25: #{tpu_custom_call.1} parent=1 // pred_fallthru
      _
    %789 = vsyncpa [#allocation3], 1
    %790 = vsyncpa [#allocation6], 1
    %791 = vsyncpa [#allocation4], 1

</llo_original>
